<compile_context>
chip_gen: v5e
topology: v5e:2x2
jax: 0.10.0
libtpu: 0.0.40
codegen_flags: <defaults>
</compile_context>

<pallas_src>
import functools

import jax
import jax.numpy as jnp
from jax import lax
from jax.experimental import pallas as pl
from jax.experimental.pallas import tpu as pltpu

# NT contraction: contract dim 1 of lhs against dim 1 of rhs (rhs transposed),
# i.e. (out, in) @ (batch, in)^T -> (out, batch) with no physical transpose.
_NT = (((1,), (1,)), ((), ()))


def _mlp_kernel(x_ref, rf_ref, w1_ref, b1_ref, w2_ref, b2_ref,
                wout_h_ref, wout_rf_ref, bout_ref, o_ref, *, apply_softmax):
    x = x_ref[...]            # (bm, input_dim)  natural layout
    rf = rf_ref[...]          # (bm, 2)          natural layout

    # fc1 + tanh  (dropout = identity in eval mode).  NT dot keeps the
    # activation lane-dense: (32, bm).
    h1 = jnp.tanh(
        lax.dot_general(w1_ref[...], x, _NT,
                        preferred_element_type=jnp.float32)
        + b1_ref[...])                                     # (32, bm)

    # fc2 + (dropout identity) + tanh
    h2 = jnp.tanh(
        jnp.dot(w2_ref[...], h1, preferred_element_type=jnp.float32)
        + b2_ref[...])                                     # (64, bm)

    # out linear on concat([h2, rf]) == Wout_h @ h2 + Wout_rf @ rf^T + b.
    # The rf term is a K=2 NT matmul -- one cheap MXU op, no rf relayout.
    logits = (jnp.dot(wout_h_ref[...], h2, preferred_element_type=jnp.float32)
              + lax.dot_general(wout_rf_ref[...], rf, _NT,
                                preferred_element_type=jnp.float32)
              + bout_ref[...])                             # (O, bm)

    if apply_softmax:
        # Softmax over the feature axis (sublanes); exact divide (one
        # (1, bm) row per step -- negligible cost, better parity).
        m = jnp.max(logits, axis=0, keepdims=True)
        e = jnp.exp(logits - m)
        denom = jnp.sum(e, axis=0, keepdims=True)
        o_ref[...] = (e / denom).astype(o_ref.dtype)
    else:
        o_ref[...] = logits.astype(o_ref.dtype)


def mlp_with_rf_preds(x, rf, params, *, output_dim, block_batch=2048):
    """Forward pass of MLP_with_RF_preds (eval mode).

    x:  (B, input_dim) float32 (or bf16)
    rf: (B, 2)         float32 (or bf16)
    params: dict with PyTorch (out, in) weight layout, column biases:
        w1 (32, D), b1 (32, 1), w2 (64, 32), b2 (64, 1),
        wout_h (O, 64), wout_rf (O, 2), bout (O, 1)
    Returns (B, output_dim).
    """
    B, input_dim = x.shape
    O = output_dim
    dtype = x.dtype

    # --- batch-tile selection ------------------------------------------------
    b_round = pl.cdiv(B, 128) * 128          # lane-aligned cover of B
    bm = min(block_batch, b_round)
    # v7x: keep >= 2 grid steps so the "parallel" axis feeds both TensorCores.
    if b_round >= 256:
        bm = min(bm, b_round // 2)
    # Keep double-buffered x/rf/out blocks well under the most conservative
    # scoped-VMEM default (v5e ~16 MiB; v7x has only 64 MiB physical).
    # This is a no-op at small feature dims but protects large input_dim.
    bytes_per_row = (input_dim + 2 + O) * 4
    vmem_budget = 12 * 1024 * 1024
    bm = min(bm, max(128, vmem_budget // (2 * bytes_per_row)))
    bm = max(128, (bm // 128) * 128)

    grid = (pl.cdiv(B, bm),)                  # ragged last block is masked

    w1, b1 = params["w1"], params["b1"]
    w2, b2 = params["w2"], params["b2"]
    wout_h, wout_rf, bout = params["wout_h"], params["wout_rf"], params["bout"]

    kernel = functools.partial(_mlp_kernel, apply_softmax=(O != 1))

    # Weights/biases: full-array, grid-invariant blocks (stay VMEM-resident,
    # no re-DMA per step).
    full = lambda a: pl.BlockSpec(a.shape, lambda i: (0, 0))

    grid_spec = pltpu.PrefetchScalarGridSpec(
        num_scalar_prefetch=0,
        grid=grid,
        in_specs=[
            pl.BlockSpec((bm, input_dim), lambda i: (i, 0)),   # x, natural
            pl.BlockSpec((bm, 2), lambda i: (i, 0)),           # rf, natural
            full(w1), full(b1),
            full(w2), full(b2),
            full(wout_h), full(wout_rf), full(bout),
        ],
        out_specs=pl.BlockSpec((O, bm), lambda i: (0, i)),     # lane-dense
    )

    outT = pl.pallas_call(
        kernel,
        out_shape=jax.ShapeDtypeStruct((O, B), dtype),
        grid_spec=grid_spec,
        compiler_params=pltpu.CompilerParams(
            dimension_semantics=("parallel",)),
    )(x, rf, w1, b1, w2, b2, wout_h, wout_rf, bout)

    # Single tiny (O, B) -> (B, O) transpose, kept so every in-kernel store is
    # an unmasked, lane-dense vst.  All big-array wrapper ops (x.T, rf.T,
    # jnp.pad, output slice) from the previous version are gone.
    return outT.T


def init_params(key, input_dim, output_dim):
    """Deterministic parameter init (PyTorch nn.Linear (out, in) layout)."""
    ks = jax.random.split(key, 6)

    def uniform(k, shape, fan_in):
        bound = 1.0 / jnp.sqrt(fan_in)
        return jax.random.uniform(k, shape, jnp.float32, -bound, bound)

    w1 = uniform(ks[0], (32, input_dim), input_dim)
    b1 = uniform(ks[1], (32, 1), input_dim)
    w2 = uniform(ks[2], (64, 32), 32)
    b2 = uniform(ks[3], (64, 1), 32)
    # out layer acts on concat([h(64), rf(2)]) -> split weight along columns.
    wout_full = uniform(ks[4], (output_dim, 64 + 2), 64 + 2)
    bout = uniform(ks[5], (output_dim, 1), 64 + 2)
    return {
        "w1": w1, "b1": b1,
        "w2": w2, "b2": b2,
        "wout_h": wout_full[:, :64],
        "wout_rf": wout_full[:, 64:],
        "bout": bout,
    }


def reference_forward(x, rf, params, output_dim):
    """Pure-JAX reference of the PyTorch forward (eval mode)."""
    h = jnp.tanh(x @ params["w1"].T + params["b1"].T)
    h = jnp.tanh(h @ params["w2"].T + params["b2"].T)
    cat = jnp.concatenate([h, rf], axis=1)
    wout = jnp.concatenate([params["wout_h"], params["wout_rf"]], axis=1)
    logits = cat @ wout.T + params["bout"].T
    if output_dim != 1:
        return jax.nn.softmax(logits, axis=1)
    return logits


if __name__ == "__main__":
    # Small feature dims as implied by the module; batch chosen so the bm cap
    # yields two "parallel" grid steps (exercises the pipeline and keeps both
    # TensorCores busy on v7x).
    B, input_dim, output_dim = 512, 16, 8

    key = jax.random.PRNGKey(0)
    kx, krf, kp = jax.random.split(key, 3)
    x = jax.random.normal(kx, (B, input_dim), jnp.float32)
    rf = jax.random.normal(krf, (B, 2), jnp.float32)
    params = init_params(kp, input_dim, output_dim)

    out = mlp_with_rf_preds(x, rf, params, output_dim=output_dim)
    out = jax.block_until_ready(out)

    ref = reference_forward(x, rf, params, output_dim)
    assert out.shape == (B, output_dim)
    # Tolerance covers MXU-vs-XLA f32 matmul pass differences / accumulation
    # order (the approx-reciprocal source of error from v2 is gone).
    assert jnp.allclose(out, ref, atol=1e-3, rtol=1e-3)

    print("KERNEL_OK")
</pallas_src>

<mosaic_0001>
module attributes {stable_mosaic.version = 11 : i64} {
  func.func @_mlp_kernel(%arg0: i32, %arg1: memref<256x16xf32, #tpu.memory_space<vmem>>, %arg2: memref<256x2xf32, #tpu.memory_space<vmem>>, %arg3: memref<32x16xf32, #tpu.memory_space<vmem>>, %arg4: memref<32x1xf32, #tpu.memory_space<vmem>>, %arg5: memref<64x32xf32, #tpu.memory_space<vmem>>, %arg6: memref<64x1xf32, #tpu.memory_space<vmem>>, %arg7: memref<8x64xf32, #tpu.memory_space<vmem>>, %arg8: memref<8x2xf32, #tpu.memory_space<vmem>>, %arg9: memref<8x1xf32, #tpu.memory_space<vmem>>, %arg10: memref<8x256xf32, #tpu.memory_space<vmem>>) attributes {dimension_semantics = [#tpu.dimension_semantics<parallel>], iteration_bounds = array<i64: 2>, scalar_prefetch = 0 : i64, scratch_operands = 0 : i64, tpu.core_type = #tpu.core_type<tc>, window_params = [{transform_indices = @transform_0, window_bounds = array<i64: 256, 16>}, {transform_indices = @transform_1, window_bounds = array<i64: 256, 2>}, {pipeline_mode = #tpu.pipeline_mode<synchronous>, transform_indices = @transform_2, window_bounds = array<i64: 32, 16>}, {pipeline_mode = #tpu.pipeline_mode<synchronous>, transform_indices = @transform_3, window_bounds = array<i64: 32, 1>}, {pipeline_mode = #tpu.pipeline_mode<synchronous>, transform_indices = @transform_4, window_bounds = array<i64: 64, 32>}, {pipeline_mode = #tpu.pipeline_mode<synchronous>, transform_indices = @transform_5, window_bounds = array<i64: 64, 1>}, {pipeline_mode = #tpu.pipeline_mode<synchronous>, transform_indices = @transform_6, window_bounds = array<i64: 8, 64>}, {pipeline_mode = #tpu.pipeline_mode<synchronous>, transform_indices = @transform_7, window_bounds = array<i64: 8, 2>}, {pipeline_mode = #tpu.pipeline_mode<synchronous>, transform_indices = @transform_8, window_bounds = array<i64: 8, 1>}, {transform_indices = @transform_9, window_bounds = array<i64: 8, 256>}]} {
    %c0 = arith.constant 0 : index
    %c0_0 = arith.constant 0 : index
    %0 = vector.load %arg1[%c0, %c0_0] : memref<256x16xf32, #tpu.memory_space<vmem>>, vector<256x16xf32>
    %c0_1 = arith.constant 0 : index
    %c0_2 = arith.constant 0 : index
    %1 = vector.load %arg2[%c0_1, %c0_2] : memref<256x2xf32, #tpu.memory_space<vmem>>, vector<256x2xf32>
    %c0_3 = arith.constant 0 : index
    %c0_4 = arith.constant 0 : index
    %2 = vector.load %arg3[%c0_3, %c0_4] : memref<32x16xf32, #tpu.memory_space<vmem>>, vector<32x16xf32>
    %cst = arith.constant dense<0.000000e+00> : vector<32x256xf32>
    %3 = tpu.matmul %2, %0, %cst {dimension_numbers = #tpu.dot_dimension_numbers<[1], [1], [0], [0], [0, 0, 1, 0], [], []>} : vector<32x16xf32>, vector<256x16xf32>, vector<32x256xf32> -> vector<32x256xf32>
    %c0_5 = arith.constant 0 : index
    %c0_6 = arith.constant 0 : index
    %4 = vector.load %arg4[%c0_5, %c0_6] : memref<32x1xf32, #tpu.memory_space<vmem>>, vector<32x1xf32>
    %5 = vector.broadcast %4 : vector<32x1xf32> to vector<32x256xf32>
    %6 = arith.addf %3, %5 : vector<32x256xf32>
    %7 = math.tanh %6 : vector<32x256xf32>
    %c0_7 = arith.constant 0 : index
    %c0_8 = arith.constant 0 : index
    %8 = vector.load %arg5[%c0_7, %c0_8] : memref<64x32xf32, #tpu.memory_space<vmem>>, vector<64x32xf32>
    %cst_9 = arith.constant dense<0.000000e+00> : vector<64x256xf32>
    %9 = tpu.matmul %8, %7, %cst_9 {dimension_numbers = #tpu.dot_dimension_numbers<[1], [0], [0], [1], [0, 0, 1, 1], [], []>} : vector<64x32xf32>, vector<32x256xf32>, vector<64x256xf32> -> vector<64x256xf32>
    %c0_10 = arith.constant 0 : index
    %c0_11 = arith.constant 0 : index
    %10 = vector.load %arg6[%c0_10, %c0_11] : memref<64x1xf32, #tpu.memory_space<vmem>>, vector<64x1xf32>
    %11 = vector.broadcast %10 : vector<64x1xf32> to vector<64x256xf32>
    %12 = arith.addf %9, %11 : vector<64x256xf32>
    %13 = math.tanh %12 : vector<64x256xf32>
    %c0_12 = arith.constant 0 : index
    %c0_13 = arith.constant 0 : index
    %14 = vector.load %arg7[%c0_12, %c0_13] : memref<8x64xf32, #tpu.memory_space<vmem>>, vector<8x64xf32>
    %cst_14 = arith.constant dense<0.000000e+00> : vector<8x256xf32>
    %15 = tpu.matmul %14, %13, %cst_14 {dimension_numbers = #tpu.dot_dimension_numbers<[1], [0], [0], [1], [0, 0, 1, 1], [], []>} : vector<8x64xf32>, vector<64x256xf32>, vector<8x256xf32> -> vector<8x256xf32>
    %c0_15 = arith.constant 0 : index
    %c0_16 = arith.constant 0 : index
    %16 = vector.load %arg8[%c0_15, %c0_16] : memref<8x2xf32, #tpu.memory_space<vmem>>, vector<8x2xf32>
    %cst_17 = arith.constant dense<0.000000e+00> : vector<8x256xf32>
    %17 = tpu.matmul %16, %1, %cst_17 {dimension_numbers = #tpu.dot_dimension_numbers<[1], [1], [0], [0], [0, 0, 1, 0], [], []>} : vector<8x2xf32>, vector<256x2xf32>, vector<8x256xf32> -> vector<8x256xf32>
    %18 = arith.addf %15, %17 : vector<8x256xf32>
    %c0_18 = arith.constant 0 : index
    %c0_19 = arith.constant 0 : index
    %19 = vector.load %arg9[%c0_18, %c0_19] : memref<8x1xf32, #tpu.memory_space<vmem>>, vector<8x1xf32>
    %20 = vector.broadcast %19 : vector<8x1xf32> to vector<8x256xf32>
    %21 = arith.addf %18, %20 : vector<8x256xf32>
    %cst_20 = arith.constant dense<0xFF800000> : vector<256xf32>
    %22 = vector.multi_reduction <maximumf>, %21, %cst_20 [0] : vector<8x256xf32> to vector<256xf32>
    %23 = vector.shape_cast %22 : vector<256xf32> to vector<1x256xf32>
    %24 = vector.broadcast %23 : vector<1x256xf32> to vector<8x256xf32>
    %25 = arith.subf %21, %24 : vector<8x256xf32>
    %26 = math.exp %25 : vector<8x256xf32>
    %cst_21 = arith.constant dense<0.000000e+00> : vector<256xf32>
    %27 = vector.multi_reduction <add>, %26, %cst_21 [0] : vector<8x256xf32> to vector<256xf32>
    %28 = vector.shape_cast %27 : vector<256xf32> to vector<1x256xf32>
    %29 = vector.broadcast %28 : vector<1x256xf32> to vector<8x256xf32>
    %30 = arith.divf %26, %29 : vector<8x256xf32>
    %c0_22 = arith.constant 0 : index
    %c0_23 = arith.constant 0 : index
    %31 = vector.load %arg10[%c0_22, %c0_23] : memref<8x256xf32, #tpu.memory_space<vmem>>, vector<8x256xf32>
    tpu.vector_store %arg10[%c0_22, %c0_23], %30 {strides = array<i32>} : memref<8x256xf32, #tpu.memory_space<vmem>>, vector<8x256xf32>,
    return
  }
  func.func @transform_0(%arg0: i32) -> (i32, i32) {
    %c0_i32 = arith.constant 0 : i32
    %c0_i32_0 = arith.constant 0 : i32
    return %arg0, %c0_i32 : i32, i32
  }
  func.func @transform_1(%arg0: i32) -> (i32, i32) {
    %c0_i32 = arith.constant 0 : i32
    %c0_i32_0 = arith.constant 0 : i32
    return %arg0, %c0_i32 : i32, i32
  }
  func.func @transform_2(%arg0: i32) -> (i32, i32) {
    %c0_i32 = arith.constant 0 : i32
    %c0_i32_0 = arith.constant 0 : i32
    %c0_i32_1 = arith.constant 0 : i32
    return %c0_i32, %c0_i32_0 : i32, i32
  }
  func.func @transform_3(%arg0: i32) -> (i32, i32) {
    %c0_i32 = arith.constant 0 : i32
    %c0_i32_0 = arith.constant 0 : i32
    %c0_i32_1 = arith.constant 0 : i32
    return %c0_i32, %c0_i32_0 : i32, i32
  }
  func.func @transform_4(%arg0: i32) -> (i32, i32) {
    %c0_i32 = arith.constant 0 : i32
    %c0_i32_0 = arith.constant 0 : i32
    %c0_i32_1 = arith.constant 0 : i32
    return %c0_i32, %c0_i32_0 : i32, i32
  }
  func.func @transform_5(%arg0: i32) -> (i32, i32) {
    %c0_i32 = arith.constant 0 : i32
    %c0_i32_0 = arith.constant 0 : i32
    %c0_i32_1 = arith.constant 0 : i32
    return %c0_i32, %c0_i32_0 : i32, i32
  }
  func.func @transform_6(%arg0: i32) -> (i32, i32) {
    %c0_i32 = arith.constant 0 : i32
    %c0_i32_0 = arith.constant 0 : i32
    %c0_i32_1 = arith.constant 0 : i32
    return %c0_i32, %c0_i32_0 : i32, i32
  }
  func.func @transform_7(%arg0: i32) -> (i32, i32) {
    %c0_i32 = arith.constant 0 : i32
    %c0_i32_0 = arith.constant 0 : i32
    %c0_i32_1 = arith.constant 0 : i32
    return %c0_i32, %c0_i32_0 : i32, i32
  }
  func.func @transform_8(%arg0: i32) -> (i32, i32) {
    %c0_i32 = arith.constant 0 : i32
    %c0_i32_0 = arith.constant 0 : i32
    %c0_i32_1 = arith.constant 0 : i32
    return %c0_i32, %c0_i32_0 : i32, i32
  }
  func.func @transform_9(%arg0: i32) -> (i32, i32) {
    %c0_i32 = arith.constant 0 : i32
    %c0_i32_0 = arith.constant 0 : i32
    return %c0_i32, %arg0 : i32, i32
  }
}

</mosaic_0001>

<llo_original>
// kernel: tpu_custom_call.1
$region0: #{tpu_custom_call.1}
  #allocation0 [shape = 'u32[]', space=smem, size = 0x4, offset = 0x4, fixed_abs, tag = 'smem constant byte address 0x4 - core index']
  #allocation1 [shape = 'u32[72,128]{1,0:T(1,128)}', space=vmem, size = 0x9000, scoped, tag = 'internal scratch']
  %s0 = inlined_call_operand.vmem [shape: f32[512,16], index: 0, kind: input, shape index: {}]
  %s1 = inlined_call_operand.vmem [shape: f32[512,2], index: 1, kind: input, shape index: {}]
  %s2 = inlined_call_operand.vmem [shape: f32[32,16], index: 2, kind: input, shape index: {}]
  %s3 = inlined_call_operand.vmem [shape: f32[32,1], index: 3, kind: input, shape index: {}]
  %s4 = inlined_call_operand.vmem [shape: f32[64,32], index: 4, kind: input, shape index: {}]
  %s5 = inlined_call_operand.vmem [shape: f32[64,1], index: 5, kind: input, shape index: {}]
  %s6 = inlined_call_operand.vmem [shape: f32[8,64], index: 6, kind: input, shape index: {}]
  %s7 = inlined_call_operand.vmem [shape: f32[8,2], index: 7, kind: input, shape index: {}]
  %s8 = inlined_call_operand.vmem [shape: f32[8,1], index: 8, kind: input, shape index: {}]
  %s9 = inlined_call_operand.hbm [shape: f32[8,512], index: 9, kind: output, shape index: {}]
  %s10 = sld [smem:[#allocation0]]
  $region69: #{tpu_custom_call.1} parent=0
    _
  %s12 = ssub.s32 1, %s10
  %s13 = scalar_select 0, %s12, %s10
  $region1: #{tpu_custom_call.1} parent=0
    #allocation2 [shape = 'u8[16384]{0}', space=vmem, size = 0x4000, scoped, tag = 'output window, operand 0']
    #allocation3 [shape = 's32[2]{0}', space=sflag, size = 0x8, scoped, tag = 'scoped memory for tpu_custom_call.1']
    %14 = vsyncpa [#allocation3], 0
    %s15 = scalar_lea.sflag [#allocation3], 1
    %16 = vsyncpa %s15, 0
    loop: start=0, step=1, limit=4
    $region2: #{tpu_custom_call.1} parent=1 // loop_pre_header
      _
    $region3: #{tpu_custom_call.1} parent=1 // loop_header
      %s18 = sphi 0, %s22
      %p19 = scmp.ge.s32.totalorder %s18, 4
      %s28 = sphi 0, %s30
      %s31 = sphi 0, %s28
      %s32 = sphi 0, %s31
      %s48 = sphi 0, %s32
      %s54 = sphi 0, %s56
      %s57 = sphi 0, %s54
      %s58 = sphi 0, %s57
      %s74 = sphi 0, %s58
      %s78 = sphi 0, %s78
      %s80 = sphi 0, %s78
      %s81 = sphi 0, %s80
      %s95 = sphi 0, %s81
      %s99 = sphi 0, %s99
      %s101 = sphi 0, %s99
      %s102 = sphi 0, %s101
      %s116 = sphi 0, %s102
      %s120 = sphi 0, %s120
      %s122 = sphi 0, %s120
      %s123 = sphi 0, %s122
      %s137 = sphi 0, %s123
      %s141 = sphi 0, %s141
      %s143 = sphi 0, %s141
      %s144 = sphi 0, %s143
      %s158 = sphi 0, %s144
      %s162 = sphi 0, %s162
      %s164 = sphi 0, %s162
      %s165 = sphi 0, %s164
      %s179 = sphi 0, %s165
      %s183 = sphi 0, %s183
      %s185 = sphi 0, %s183
      %s186 = sphi 0, %s185
      %s200 = sphi 0, %s186
      %s204 = sphi 0, %s204
      %s206 = sphi 0, %s204
      %s207 = sphi 0, %s206
      %s221 = sphi 0, %s207
      %s227 = sphi 0, %s229
      %s230 = sphi 0, %s227
      %s231 = sphi 0, %s230
      %s247 = sphi 0, %s231
    $region4: #{tpu_custom_call.1} parent=1 // loop_header_branch
      %21 = sbr.rel (%p19) target = $region8
    $region5: #{tpu_custom_call.1} parent=1 // loop_body
      %s23 = ssub.s32 %s18, 1
      %s24 = ssub.s32 %s18, 2
      %s25 = sadd.s32 %s18, 1
      %s26 = ssub.s32 %s18, %s25
      %p27 = scmp.eq.s32.totalorder %s26, 0
      %s29 = sadd.s32 %s28, 1
      %s30 = scalar_select %p27, %s28, %s29
      %p33 = pneg %p27
      %p34 = scmp.eq.s32.totalorder %s18, 1
      %p35 = por %p33, %p34
      %p36 = scmp.ne.s32.totalorder %s28, %s31
      %p37 = scmp.eq.s32.totalorder %s18, 0
      %p38 = por %p36, %p37
      %p39 = scmp.ne.s32.totalorder %s28, %s31
      %p40 = scmp.eq.s32.totalorder %s23, 1
      %p41 = por %p39, %p40
      %p42 = scmp.ne.s32.totalorder %s31, %s32
      %p43 = scmp.eq.s32.totalorder %s23, 0
      %p44 = por %p42, %p43
      %p45 = scmp.ne.s32.totalorder %s31, %s32
      %p46 = scmp.eq.s32.totalorder %s24, 1
      %p47 = por %p45, %p46
      %p49 = scmp.ne.s32.totalorder %s32, %s48
      %p50 = scmp.eq.s32.totalorder %s24, 0
      %p51 = por %p49, %p50
      %s52 = ssub.s32 %s18, %s25
      %p53 = scmp.eq.s32.totalorder %s52, 0
      %s55 = sadd.s32 %s54, 1
      %s56 = scalar_select %p53, %s54, %s55
      %p59 = pneg %p53
      %p60 = scmp.eq.s32.totalorder %s18, 1
      %p61 = por %p59, %p60
      %p62 = scmp.ne.s32.totalorder %s54, %s57
      %p63 = scmp.eq.s32.totalorder %s18, 0
      %p64 = por %p62, %p63
      %p65 = scmp.ne.s32.totalorder %s54, %s57
      %p66 = scmp.eq.s32.totalorder %s23, 1
      %p67 = por %p65, %p66
      %p68 = scmp.ne.s32.totalorder %s57, %s58
      %p69 = scmp.eq.s32.totalorder %s23, 0
      %p70 = por %p68, %p69
      %p71 = scmp.ne.s32.totalorder %s57, %s58
      %p72 = scmp.eq.s32.totalorder %s24, 1
      %p73 = por %p71, %p72
      %p75 = scmp.ne.s32.totalorder %s58, %s74
      %p76 = scmp.eq.s32.totalorder %s24, 0
      %p77 = por %p75, %p76
      %s79 = sadd.s32 %s78, 1
      %p82 = scmp.eq.s32.totalorder %s18, 1
      %p83 = scmp.ne.s32.totalorder %s78, %s80
      %p84 = scmp.eq.s32.totalorder %s18, 0
      %p85 = por %p83, %p84
      %p86 = scmp.ne.s32.totalorder %s78, %s80
      %p87 = scmp.eq.s32.totalorder %s23, 1
      %p88 = por %p86, %p87
      %p89 = scmp.ne.s32.totalorder %s80, %s81
      %p90 = scmp.eq.s32.totalorder %s23, 0
      %p91 = por %p89, %p90
      %p92 = scmp.ne.s32.totalorder %s80, %s81
      %p93 = scmp.eq.s32.totalorder %s24, 1
      %p94 = por %p92, %p93
      %p96 = scmp.ne.s32.totalorder %s81, %s95
      %p97 = scmp.eq.s32.totalorder %s24, 0
      %p98 = por %p96, %p97
      %s100 = sadd.s32 %s99, 1
      %p103 = scmp.eq.s32.totalorder %s18, 1
      %p104 = scmp.ne.s32.totalorder %s99, %s101
      %p105 = scmp.eq.s32.totalorder %s18, 0
      %p106 = por %p104, %p105
      %p107 = scmp.ne.s32.totalorder %s99, %s101
      %p108 = scmp.eq.s32.totalorder %s23, 1
      %p109 = por %p107, %p108
      %p110 = scmp.ne.s32.totalorder %s101, %s102
      %p111 = scmp.eq.s32.totalorder %s23, 0
      %p112 = por %p110, %p111
      %p113 = scmp.ne.s32.totalorder %s101, %s102
      %p114 = scmp.eq.s32.totalorder %s24, 1
      %p115 = por %p113, %p114
      %p117 = scmp.ne.s32.totalorder %s102, %s116
      %p118 = scmp.eq.s32.totalorder %s24, 0
      %p119 = por %p117, %p118
      %s121 = sadd.s32 %s120, 1
      %p124 = scmp.eq.s32.totalorder %s18, 1
      %p125 = scmp.ne.s32.totalorder %s120, %s122
      %p126 = scmp.eq.s32.totalorder %s18, 0
      %p127 = por %p125, %p126
      %p128 = scmp.ne.s32.totalorder %s120, %s122
      %p129 = scmp.eq.s32.totalorder %s23, 1
      %p130 = por %p128, %p129
      %p131 = scmp.ne.s32.totalorder %s122, %s123
      %p132 = scmp.eq.s32.totalorder %s23, 0
      %p133 = por %p131, %p132
      %p134 = scmp.ne.s32.totalorder %s122, %s123
      %p135 = scmp.eq.s32.totalorder %s24, 1
      %p136 = por %p134, %p135
      %p138 = scmp.ne.s32.totalorder %s123, %s137
      %p139 = scmp.eq.s32.totalorder %s24, 0
      %p140 = por %p138, %p139
      %s142 = sadd.s32 %s141, 1
      %p145 = scmp.eq.s32.totalorder %s18, 1
      %p146 = scmp.ne.s32.totalorder %s141, %s143
      %p147 = scmp.eq.s32.totalorder %s18, 0
      %p148 = por %p146, %p147
      %p149 = scmp.ne.s32.totalorder %s141, %s143
      %p150 = scmp.eq.s32.totalorder %s23, 1
      %p151 = por %p149, %p150
      %p152 = scmp.ne.s32.totalorder %s143, %s144
      %p153 = scmp.eq.s32.totalorder %s23, 0
      %p154 = por %p152, %p153
      %p155 = scmp.ne.s32.totalorder %s143, %s144
      %p156 = scmp.eq.s32.totalorder %s24, 1
      %p157 = por %p155, %p156
      %p159 = scmp.ne.s32.totalorder %s144, %s158
      %p160 = scmp.eq.s32.totalorder %s24, 0
      %p161 = por %p159, %p160
      %s163 = sadd.s32 %s162, 1
      %p166 = scmp.eq.s32.totalorder %s18, 1
      %p167 = scmp.ne.s32.totalorder %s162, %s164
      %p168 = scmp.eq.s32.totalorder %s18, 0
      %p169 = por %p167, %p168
      %p170 = scmp.ne.s32.totalorder %s162, %s164
      %p171 = scmp.eq.s32.totalorder %s23, 1
      %p172 = por %p170, %p171
      %p173 = scmp.ne.s32.totalorder %s164, %s165
      %p174 = scmp.eq.s32.totalorder %s23, 0
      %p175 = por %p173, %p174
      %p176 = scmp.ne.s32.totalorder %s164, %s165
      %p177 = scmp.eq.s32.totalorder %s24, 1
      %p178 = por %p176, %p177
      %p180 = scmp.ne.s32.totalorder %s165, %s179
      %p181 = scmp.eq.s32.totalorder %s24, 0
      %p182 = por %p180, %p181
      %s184 = sadd.s32 %s183, 1
      %p187 = scmp.eq.s32.totalorder %s18, 1
      %p188 = scmp.ne.s32.totalorder %s183, %s185
      %p189 = scmp.eq.s32.totalorder %s18, 0
      %p190 = por %p188, %p189
      %p191 = scmp.ne.s32.totalorder %s183, %s185
      %p192 = scmp.eq.s32.totalorder %s23, 1
      %p193 = por %p191, %p192
      %p194 = scmp.ne.s32.totalorder %s185, %s186
      %p195 = scmp.eq.s32.totalorder %s23, 0
      %p196 = por %p194, %p195
      %p197 = scmp.ne.s32.totalorder %s185, %s186
      %p198 = scmp.eq.s32.totalorder %s24, 1
      %p199 = por %p197, %p198
      %p201 = scmp.ne.s32.totalorder %s186, %s200
      %p202 = scmp.eq.s32.totalorder %s24, 0
      %p203 = por %p201, %p202
      %s205 = sadd.s32 %s204, 1
      %p208 = scmp.eq.s32.totalorder %s18, 1
      %p209 = scmp.ne.s32.totalorder %s204, %s206
      %p210 = scmp.eq.s32.totalorder %s18, 0
      %p211 = por %p209, %p210
      %p212 = scmp.ne.s32.totalorder %s204, %s206
      %p213 = scmp.eq.s32.totalorder %s23, 1
      %p214 = por %p212, %p213
      %p215 = scmp.ne.s32.totalorder %s206, %s207
      %p216 = scmp.eq.s32.totalorder %s23, 0
      %p217 = por %p215, %p216
      %p218 = scmp.ne.s32.totalorder %s206, %s207
      %p219 = scmp.eq.s32.totalorder %s24, 1
      %p220 = por %p218, %p219
      %p222 = scmp.ne.s32.totalorder %s207, %s221
      %p223 = scmp.eq.s32.totalorder %s24, 0
      %p224 = por %p222, %p223
      %s225 = ssub.s32 %s18, %s25
      %p226 = scmp.eq.s32.totalorder %s225, 0
      %s228 = sadd.s32 %s227, 1
      %s229 = scalar_select %p226, %s227, %s228
      %p232 = pneg %p226
      %p233 = scmp.eq.s32.totalorder %s18, 1
      %p234 = por %p232, %p233
      %p235 = scmp.ne.s32.totalorder %s227, %s230
      %p236 = scmp.eq.s32.totalorder %s18, 0
      %p237 = por %p235, %p236
      %p238 = scmp.ne.s32.totalorder %s227, %s230
      %p239 = scmp.eq.s32.totalorder %s23, 1
      %p240 = por %p238, %p239
      %p241 = scmp.ne.s32.totalorder %s230, %s231
      %p242 = scmp.eq.s32.totalorder %s23, 0
      %p243 = por %p241, %p242
      %p244 = scmp.ne.s32.totalorder %s230, %s231
      %p245 = scmp.eq.s32.totalorder %s24, 1
      %p246 = por %p244, %p245
      %p248 = scmp.ne.s32.totalorder %s231, %s247
      %p249 = scmp.eq.s32.totalorder %s24, 0
      %p250 = por %p248, %p249
      %p251 = scmp.le.s32.totalorder 1, %s18
      %p252 = scmp.lt.s32.totalorder %s18, 3
      %p253 = pnand %p251, %p252
      %p254 = pneg %p253
      // Predicated region
      $region9: #{tpu_custom_call.1} parent=5 // pred_check
        _
      $region10: #{tpu_custom_call.1} parent=5 // pred_check_branch
        %256 = sbr.rel (%p253) target = $region12
      $region11: #{tpu_custom_call.1} parent=5 // pred_region
        %s257 = ssub.s32 %s18, 1
        // Predicated region
        $region13: #{tpu_custom_call.1} parent=11 // pred_check
          %p258 = pneg %p91
        $region14: #{tpu_custom_call.1} parent=11 // pred_check_branch
          %260 = sbr.rel (%p258) target = $region16
        $region15: #{tpu_custom_call.1} parent=11 // pred_region
          _
        $region16: #{tpu_custom_call.1} parent=11 // pred_fallthru
          _
        // Predicated region
        $region17: #{tpu_custom_call.1} parent=11 // pred_check
          %p261 = pneg %p112
        $region18: #{tpu_custom_call.1} parent=11 // pred_check_branch
          %263 = sbr.rel (%p261) target = $region20
        $region19: #{tpu_custom_call.1} parent=11 // pred_region
          _
        $region20: #{tpu_custom_call.1} parent=11 // pred_fallthru
          _
        // Predicated region
        $region21: #{tpu_custom_call.1} parent=11 // pred_check
          %p264 = pneg %p133
        $region22: #{tpu_custom_call.1} parent=11 // pred_check_branch
          %266 = sbr.rel (%p264) target = $region24
        $region23: #{tpu_custom_call.1} parent=11 // pred_region
          _
        $region24: #{tpu_custom_call.1} parent=11 // pred_fallthru
          _
        // Predicated region
        $region25: #{tpu_custom_call.1} parent=11 // pred_check
          %p267 = pneg %p154
        $region26: #{tpu_custom_call.1} parent=11 // pred_check_branch
          %269 = sbr.rel (%p267) target = $region28
        $region27: #{tpu_custom_call.1} parent=11 // pred_region
          _
        $region28: #{tpu_custom_call.1} parent=11 // pred_fallthru
          _
        // Predicated region
        $region29: #{tpu_custom_call.1} parent=11 // pred_check
          %p270 = pneg %p175
        $region30: #{tpu_custom_call.1} parent=11 // pred_check_branch
          %272 = sbr.rel (%p270) target = $region32
        $region31: #{tpu_custom_call.1} parent=11 // pred_region
          _
        $region32: #{tpu_custom_call.1} parent=11 // pred_fallthru
          _
        // Predicated region
        $region33: #{tpu_custom_call.1} parent=11 // pred_check
          %p273 = pneg %p196
        $region34: #{tpu_custom_call.1} parent=11 // pred_check_branch
          %275 = sbr.rel (%p273) target = $region36
        $region35: #{tpu_custom_call.1} parent=11 // pred_region
          _
        $region36: #{tpu_custom_call.1} parent=11 // pred_fallthru
          _
        // Predicated region
        $region37: #{tpu_custom_call.1} parent=11 // pred_check
          %p276 = pneg %p217
        $region38: #{tpu_custom_call.1} parent=11 // pred_check_branch
          %278 = sbr.rel (%p276) target = $region40
        $region39: #{tpu_custom_call.1} parent=11 // pred_region
          _
        $region40: #{tpu_custom_call.1} parent=11 // pred_fallthru
          _
      $region12: #{tpu_custom_call.1} parent=5 // pred_fallthru
        _
      %p279 = scmp.lt.s32.totalorder %s18, 2
      // Predicated region
      $region41: #{tpu_custom_call.1} parent=5 // pred_check
        %p280 = pneg %p279
      $region42: #{tpu_custom_call.1} parent=5 // pred_check_branch
        %282 = sbr.rel (%p280) target = $region44
      $region43: #{tpu_custom_call.1} parent=5 // pred_region
        // Predicated region
        $region45: #{tpu_custom_call.1} parent=43 // pred_check
          %p283 = pneg %p38
        $region46: #{tpu_custom_call.1} parent=43 // pred_check_branch
          %285 = sbr.rel (%p283) target = $region48
        $region47: #{tpu_custom_call.1} parent=43 // pred_region
          %s286 = smul.u32 32, %s18
          %p287 = scmp.lt.s32.totalorder %s286, 63
          %s288 = scalar_select %p287, %s286, 63
          %s289 = smul.addr %s288, 8
          %s290 = scalar_lea.vmem %s0, %s289
          %s291 = smul.u32 32, %s18
        $region48: #{tpu_custom_call.1} parent=43 // pred_fallthru
          _
        // Predicated region
        $region49: #{tpu_custom_call.1} parent=43 // pred_check
          %p292 = pneg %p64
        $region50: #{tpu_custom_call.1} parent=43 // pred_check_branch
          %294 = sbr.rel (%p292) target = $region52
        $region51: #{tpu_custom_call.1} parent=43 // pred_region
          %s295 = smul.u32 32, %s18
          %p296 = scmp.lt.s32.totalorder %s295, 63
          %s297 = scalar_select %p296, %s295, 63
          %s298 = smul.addr %s297, 8
          %s299 = scalar_lea.vmem %s1, %s298
          %s300 = smul.u32 32, %s18
        $region52: #{tpu_custom_call.1} parent=43 // pred_fallthru
          _
      $region44: #{tpu_custom_call.1} parent=5 // pred_fallthru
        _
      %p301 = scmp.le.s32.totalorder 1, %s18
      %p302 = scmp.lt.s32.totalorder %s18, 3
      %p303 = pnand %p301, %p302
      %p304 = pneg %p303
      // Predicated region
      $region53: #{tpu_custom_call.1} parent=5 // pred_check
        _
      $region54: #{tpu_custom_call.1} parent=5 // pred_check_branch
        %306 = sbr.rel (%p303) target = $region56
      $region55: #{tpu_custom_call.1} parent=5 // pred_region
        %s307 = ssub.s32 %s18, 1
        %s308 = smul.u32 32, %s23
        %p309 = scmp.lt.s32.totalorder %s308, 63
        %s310 = scalar_select %p309, %s308, 63
        %s311 = smul.addr %s310, 8
        %s312 = scalar_lea.vmem %s0, %s311
        %p313 = pneg %p44
        %p314 = pneg %p41
        %s315 = smul.u32 32, %s23
        %p316 = scmp.lt.s32.totalorder %s315, 63
        %s317 = scalar_select %p316, %s315, 63
        %s318 = smul.addr %s317, 8
        %s319 = scalar_lea.vmem %s1, %s318
        %p320 = pneg %p70
        %p321 = pneg %p67
        %p322 = pneg %p91
        %p323 = pneg %p88
        %p324 = pneg %p112
        %p325 = pneg %p109
        %p326 = pneg %p133
        %p327 = pneg %p130
        %p328 = pneg %p154
        %p329 = pneg %p151
        %p330 = pneg %p175
        %p331 = pneg %p172
        %p332 = pneg %p196
        %p333 = pneg %p193
        %p334 = pneg %p217
        %p335 = pneg %p214
        %p336 = pneg %p243
        %p337 = pneg %p240
        %s338 = sand.u32 %s230, 1
        %s339 = scalar_lea.sflag [#allocation3], %s338
        %s340 = sand.u32 %s230, 1
        %s341 = smul.addr %s340, 16
        %s342 = scalar_lea.vmem [#allocation2], %s341
        %s343 = smul.u32 32, %s23
        %p344 = scmp.lt.s32.totalorder %s343, 63
        %s345 = scalar_select %p344, %s343, 63
        %s346 = smul.addr %s345, 8
        %s347 = scalar_lea.vmem %s0, %s346
        %s348 = smul.u32 32, %s23
        %s349 = smul.u32 32, %s23
        %p350 = scmp.lt.s32.totalorder %s349, 63
        %s351 = scalar_select %p350, %s349, 63
        %s352 = smul.addr %s351, 8
        %s353 = scalar_lea.vmem %s1, %s352
        %s354 = smul.u32 32, %s23
        %s355 = smul.u32 2, %s23
        %v356 = vld [vmem:[%s347] sm:$0xff]
        %v357 = vld [vmem:[%s347 + $0x8] sm:$0xff]
        %v358 = vld [vmem:[%s347 + $0x10] sm:$0xff]
        %v359 = vld [vmem:[%s347 + $0x18] sm:$0xff]
        %v360 = vld [vmem:[%s347 + $0x20] sm:$0xff]
        %v361 = vld [vmem:[%s347 + $0x28] sm:$0xff]
        %v362 = vld [vmem:[%s347 + $0x30] sm:$0xff]
        %v363 = vld [vmem:[%s347 + $0x38] sm:$0xff]
        %v364 = vld [vmem:[%s347 + $0x40] sm:$0xff]
        %v365 = vld [vmem:[%s347 + $0x48] sm:$0xff]
        %v366 = vld [vmem:[%s347 + $0x50] sm:$0xff]
        %v367 = vld [vmem:[%s347 + $0x58] sm:$0xff]
        %v368 = vld [vmem:[%s347 + $0x60] sm:$0xff]
        %v369 = vld [vmem:[%s347 + $0x68] sm:$0xff]
        %v370 = vld [vmem:[%s347 + $0x70] sm:$0xff]
        %v371 = vld [vmem:[%s347 + $0x78] sm:$0xff]
        %v372 = vld [vmem:[%s347 + $0x80] sm:$0xff]
        %v373 = vld [vmem:[%s347 + $0x88] sm:$0xff]
        %v374 = vld [vmem:[%s347 + $0x90] sm:$0xff]
        %v375 = vld [vmem:[%s347 + $0x98] sm:$0xff]
        %v376 = vld [vmem:[%s347 + $0xa0] sm:$0xff]
        %v377 = vld [vmem:[%s347 + $0xa8] sm:$0xff]
        %v378 = vld [vmem:[%s347 + $0xb0] sm:$0xff]
        %v379 = vld [vmem:[%s347 + $0xb8] sm:$0xff]
        %v380 = vld [vmem:[%s347 + $0xc0] sm:$0xff]
        %v381 = vld [vmem:[%s347 + $0xc8] sm:$0xff]
        %v382 = vld [vmem:[%s347 + $0xd0] sm:$0xff]
        %v383 = vld [vmem:[%s347 + $0xd8] sm:$0xff]
        %v384 = vld [vmem:[%s347 + $0xe0] sm:$0xff]
        %v385 = vld [vmem:[%s347 + $0xe8] sm:$0xff]
        %v386 = vld [vmem:[%s347 + $0xf0] sm:$0xff]
        %v387 = vld [vmem:[%s347 + $0xf8] sm:$0xff]
        %v388 = vld [vmem:[%s353] sm:$0xff]
        %v389 = vld [vmem:[%s353 + $0x8] sm:$0xff]
        %v390 = vld [vmem:[%s353 + $0x10] sm:$0xff]
        %v391 = vld [vmem:[%s353 + $0x18] sm:$0xff]
        %v392 = vld [vmem:[%s353 + $0x20] sm:$0xff]
        %v393 = vld [vmem:[%s353 + $0x28] sm:$0xff]
        %v394 = vld [vmem:[%s353 + $0x30] sm:$0xff]
        %v395 = vld [vmem:[%s353 + $0x38] sm:$0xff]
        %v396 = vld [vmem:[%s353 + $0x40] sm:$0xff]
        %v397 = vld [vmem:[%s353 + $0x48] sm:$0xff]
        %v398 = vld [vmem:[%s353 + $0x50] sm:$0xff]
        %v399 = vld [vmem:[%s353 + $0x58] sm:$0xff]
        %v400 = vld [vmem:[%s353 + $0x60] sm:$0xff]
        %v401 = vld [vmem:[%s353 + $0x68] sm:$0xff]
        %v402 = vld [vmem:[%s353 + $0x70] sm:$0xff]
        %v403 = vld [vmem:[%s353 + $0x78] sm:$0xff]
        %v404 = vld [vmem:[%s353 + $0x80] sm:$0xff]
        %v405 = vld [vmem:[%s353 + $0x88] sm:$0xff]
        %v406 = vld [vmem:[%s353 + $0x90] sm:$0xff]
        %v407 = vld [vmem:[%s353 + $0x98] sm:$0xff]
        %v408 = vld [vmem:[%s353 + $0xa0] sm:$0xff]
        %v409 = vld [vmem:[%s353 + $0xa8] sm:$0xff]
        %v410 = vld [vmem:[%s353 + $0xb0] sm:$0xff]
        %v411 = vld [vmem:[%s353 + $0xb8] sm:$0xff]
        %v412 = vld [vmem:[%s353 + $0xc0] sm:$0xff]
        %v413 = vld [vmem:[%s353 + $0xc8] sm:$0xff]
        %v414 = vld [vmem:[%s353 + $0xd0] sm:$0xff]
        %v415 = vld [vmem:[%s353 + $0xd8] sm:$0xff]
        %v416 = vld [vmem:[%s353 + $0xe0] sm:$0xff]
        %v417 = vld [vmem:[%s353 + $0xe8] sm:$0xff]
        %v418 = vld [vmem:[%s353 + $0xf0] sm:$0xff]
        %v419 = vld [vmem:[%s353 + $0xf8] sm:$0xff]
        %v420 = vld [vmem:[%s2] sm:$0xff]
        %v421 = vld [vmem:[%s2 + $0x8] sm:$0xff]
        %v422 = vld [vmem:[%s2 + $0x10] sm:$0xff]
        %v423 = vld [vmem:[%s2 + $0x18] sm:$0xff]
        %v424 = vld [vmem:[%s3] sm:$0xff]
        %v425 = vld [vmem:[%s3 + $0x8] sm:$0xff]
        %v426 = vld [vmem:[%s3 + $0x10] sm:$0xff]
        %v427 = vld [vmem:[%s3 + $0x18] sm:$0xff]
        %429 = vset.pattern.permute.xlu0 0
        %430 = vperm.xlu0 %429, %v424
        %v431 = vpop.permute.xlu0 %430
        %434 = vset.pattern.permute.xlu0 0
        %435 = vperm.xlu0 %434, %v425
        %v436 = vpop.permute.xlu0 %435
        %439 = vset.pattern.permute.xlu0 0
        %440 = vperm.xlu0 %439, %v426
        %v441 = vpop.permute.xlu0 %440
        %444 = vset.pattern.permute.xlu0 0
        %445 = vperm.xlu0 %444, %v427
        %v446 = vpop.permute.xlu0 %445
        %vm448 = vcmask 130048
        %v450 = vsel %vm448, %v420, 0
        %v453 = vsel %vm448, %v421, 0
        %v456 = vsel %vm448, %v422, 0
        %v459 = vsel %vm448, %v423, 0
        %v462 = vsel %vm448, %v356, 0
        %v465 = vsel %vm448, %v357, 0
        %v468 = vsel %vm448, %v358, 0
        %v471 = vsel %vm448, %v359, 0
        %v474 = vsel %vm448, %v360, 0
        %v477 = vsel %vm448, %v361, 0
        %v480 = vsel %vm448, %v362, 0
        %v483 = vsel %vm448, %v363, 0
        %v486 = vsel %vm448, %v364, 0
        %v489 = vsel %vm448, %v365, 0
        %v492 = vsel %vm448, %v366, 0
        %v495 = vsel %vm448, %v367, 0
        %v498 = vsel %vm448, %v368, 0
        %v501 = vsel %vm448, %v369, 0
        %v504 = vsel %vm448, %v370, 0
        %v507 = vsel %vm448, %v371, 0
        %v510 = vsel %vm448, %v372, 0
        %v513 = vsel %vm448, %v373, 0
        %v516 = vsel %vm448, %v374, 0
        %v519 = vsel %vm448, %v375, 0
        %v522 = vsel %vm448, %v376, 0
        %v525 = vsel %vm448, %v377, 0
        %v528 = vsel %vm448, %v378, 0
        %v531 = vsel %vm448, %v379, 0
        %v534 = vsel %vm448, %v380, 0
        %v537 = vsel %vm448, %v381, 0
        %v540 = vsel %vm448, %v382, 0
        %v543 = vsel %vm448, %v383, 0
        %v546 = vsel %vm448, %v384, 0
        %v549 = vsel %vm448, %v385, 0
        %v552 = vsel %vm448, %v386, 0
        %v555 = vsel %vm448, %v387, 0
        %557 = vmatpush.xpose.msra.mxu0 %v507
        %558 = vmatpush.xpose.msra.mxu0 %v504
        %559 = vmatpush.xpose.msra.mxu0 %v501
        %560 = vmatpush.xpose.msra.mxu0 %v498
        %561 = vmatpush.xpose.msra.mxu0 %v495
        %562 = vmatpush.xpose.msra.mxu0 %v492
        %563 = vmatpush.xpose.msra.mxu0 %v489
        %564 = vmatpush.xpose.msra.mxu0 %v486
        %565 = vmatpush.xpose.msra.mxu0 %v483
        %566 = vmatpush.xpose.msra.mxu0 %v480
        %567 = vmatpush.xpose.msra.mxu0 %v477
        %568 = vmatpush.xpose.msra.mxu0 %v474
        %569 = vmatpush.xpose.msra.mxu0 %v471
        %570 = vmatpush.xpose.msra.mxu0 %v468
        %571 = vmatpush.xpose.msra.mxu0 %v465
        %572 = vmatpush.xpose.msra.mxu0 %v462
        %573 = vmatmul.f32.gmra.mxu0 %v450
        %v574 = vpop.f32.mrf.mxu0
        %v575 = vadd.f32 %v431, %v574
        %576 = vmatmul.f32.gmra.mxu0 %v453
        %v577 = vpop.f32.mrf.mxu0
        %v578 = vadd.f32 %v436, %v577
        %579 = vmatmul.f32.gmra.mxu0 %v456
        %v580 = vpop.f32.mrf.mxu0
        %v581 = vadd.f32 %v441, %v580
        %582 = vmatmul.f32.gmra.mxu0 %v459
        %v583 = vpop.f32.mrf.mxu0
        %v584 = vadd.f32 %v446, %v583
        %585 = vdwg.mxu0
        %586 = vmatpush.xpose.msra.mxu0 %v555
        %587 = vmatpush.xpose.msra.mxu0 %v552
        %588 = vmatpush.xpose.msra.mxu0 %v549
        %589 = vmatpush.xpose.msra.mxu0 %v546
        %590 = vmatpush.xpose.msra.mxu0 %v543
        %591 = vmatpush.xpose.msra.mxu0 %v540
        %592 = vmatpush.xpose.msra.mxu0 %v537
        %593 = vmatpush.xpose.msra.mxu0 %v534
        %594 = vmatpush.xpose.msra.mxu0 %v531
        %595 = vmatpush.xpose.msra.mxu0 %v528
        %596 = vmatpush.xpose.msra.mxu0 %v525
        %597 = vmatpush.xpose.msra.mxu0 %v522
        %598 = vmatpush.xpose.msra.mxu0 %v519
        %599 = vmatpush.xpose.msra.mxu0 %v516
        %600 = vmatpush.xpose.msra.mxu0 %v513
        %601 = vmatpush.xpose.msra.mxu0 %v510
        %602 = vmatmul.f32.gmra.mxu0 %v450
        %v603 = vpop.f32.mrf.mxu0
        %v604 = vadd.f32 %v431, %v603
        %605 = vmatmul.f32.gmra.mxu0 %v453
        %v606 = vpop.f32.mrf.mxu0
        %v607 = vadd.f32 %v436, %v606
        %608 = vmatmul.f32.gmra.mxu0 %v456
        %v609 = vpop.f32.mrf.mxu0
        %v610 = vadd.f32 %v441, %v609
        %611 = vmatmul.f32.gmra.mxu0 %v459
        %v612 = vpop.f32.mrf.mxu0
        %v613 = vadd.f32 %v446, %v612
        %614 = vdwg.mxu0
        %v615 = vtanh.pop %v575
        %v616 = vtanh.pop %v604
        %v617 = vtanh.pop %v578
        %v618 = vtanh.pop %v607
        %v619 = vtanh.pop %v581
        %v620 = vtanh.pop %v610
        %v621 = vtanh.pop %v584
        %v622 = vtanh.pop %v613
        %v623 = vld [vmem:[%s4] sm:$0xff]
        %v624 = vld [vmem:[%s4 + $0x8] sm:$0xff]
        %v625 = vld [vmem:[%s4 + $0x10] sm:$0xff]
        %v626 = vld [vmem:[%s4 + $0x18] sm:$0xff]
        %v627 = vld [vmem:[%s4 + $0x20] sm:$0xff]
        %v628 = vld [vmem:[%s4 + $0x28] sm:$0xff]
        %v629 = vld [vmem:[%s4 + $0x30] sm:$0xff]
        %v630 = vld [vmem:[%s4 + $0x38] sm:$0xff]
        %v631 = vld [vmem:[%s5] sm:$0xff]
        %v632 = vld [vmem:[%s5 + $0x8] sm:$0xff]
        %v633 = vld [vmem:[%s5 + $0x10] sm:$0xff]
        %v634 = vld [vmem:[%s5 + $0x18] sm:$0xff]
        %v635 = vld [vmem:[%s5 + $0x20] sm:$0xff]
        %v636 = vld [vmem:[%s5 + $0x28] sm:$0xff]
        %v637 = vld [vmem:[%s5 + $0x30] sm:$0xff]
        %v638 = vld [vmem:[%s5 + $0x38] sm:$0xff]
        %640 = vset.pattern.permute.xlu0 0
        %641 = vperm.xlu0 %640, %v631
        %v642 = vpop.permute.xlu0 %641
        %645 = vset.pattern.permute.xlu0 0
        %646 = vperm.xlu0 %645, %v632
        %v647 = vpop.permute.xlu0 %646
        %650 = vset.pattern.permute.xlu0 0
        %651 = vperm.xlu0 %650, %v633
        %v652 = vpop.permute.xlu0 %651
        %655 = vset.pattern.permute.xlu0 0
        %656 = vperm.xlu0 %655, %v634
        %v657 = vpop.permute.xlu0 %656
        %660 = vset.pattern.permute.xlu0 0
        %661 = vperm.xlu0 %660, %v635
        %v662 = vpop.permute.xlu0 %661
        %665 = vset.pattern.permute.xlu0 0
        %666 = vperm.xlu0 %665, %v636
        %v667 = vpop.permute.xlu0 %666
        %670 = vset.pattern.permute.xlu0 0
        %671 = vperm.xlu0 %670, %v637
        %v672 = vpop.permute.xlu0 %671
        %675 = vset.pattern.permute.xlu0 0
        %676 = vperm.xlu0 %675, %v638
        %v677 = vpop.permute.xlu0 %676
        %vm679 = vcmask 261120
        %v681 = vsel %vm679, %v623, 0
        %v684 = vsel %vm679, %v624, 0
        %v687 = vsel %vm679, %v625, 0
        %v690 = vsel %vm679, %v626, 0
        %v693 = vsel %vm679, %v627, 0
        %v696 = vsel %vm679, %v628, 0
        %v699 = vsel %vm679, %v629, 0
        %v702 = vsel %vm679, %v630, 0
        %704 = vmatpush.msra.mxu0 0.0
        %705 = vmatpush.msra.mxu0 0.0
        %706 = vmatpush.msra.mxu0 0.0
        %707 = vmatpush.msra.mxu0 0.0
        %708 = vmatpush.msra.mxu0 0.0
        %709 = vmatpush.msra.mxu0 0.0
        %710 = vmatpush.msra.mxu0 0.0
        %711 = vmatpush.msra.mxu0 0.0
        %712 = vmatpush.msra.mxu0 0.0
        %713 = vmatpush.msra.mxu0 0.0
        %714 = vmatpush.msra.mxu0 0.0
        %715 = vmatpush.msra.mxu0 0.0
        %716 = vmatpush.msra.mxu0 %v621
        %717 = vmatpush.msra.mxu0 %v619
        %718 = vmatpush.msra.mxu0 %v617
        %719 = vmatpush.msra.mxu0 %v615
        %720 = vmatmul.f32.gmra.mxu0 %v681
        %v721 = vpop.f32.mrf.mxu0
        %v722 = vadd.f32 %v642, %v721
        %723 = vmatmul.f32.gmra.mxu0 %v684
        %v724 = vpop.f32.mrf.mxu0
        %v725 = vadd.f32 %v647, %v724
        %726 = vmatmul.f32.gmra.mxu0 %v687
        %v727 = vpop.f32.mrf.mxu0
        %v728 = vadd.f32 %v652, %v727
        %729 = vmatmul.f32.gmra.mxu0 %v690
        %v730 = vpop.f32.mrf.mxu0
        %v731 = vadd.f32 %v657, %v730
        %732 = vmatmul.f32.gmra.mxu0 %v693
        %v733 = vpop.f32.mrf.mxu0
        %v734 = vadd.f32 %v662, %v733
        %735 = vmatmul.f32.gmra.mxu0 %v696
        %v736 = vpop.f32.mrf.mxu0
        %v737 = vadd.f32 %v667, %v736
        %738 = vmatmul.f32.gmra.mxu0 %v699
        %v739 = vpop.f32.mrf.mxu0
        %v740 = vadd.f32 %v672, %v739
        %741 = vmatmul.f32.gmra.mxu0 %v702
        %v742 = vpop.f32.mrf.mxu0
        %v743 = vadd.f32 %v677, %v742
        %744 = vdwg.mxu0
        %745 = vmatpush.msra.mxu0 0.0
        %746 = vmatpush.msra.mxu0 0.0
        %747 = vmatpush.msra.mxu0 0.0
        %748 = vmatpush.msra.mxu0 0.0
        %749 = vmatpush.msra.mxu0 0.0
        %750 = vmatpush.msra.mxu0 0.0
        %751 = vmatpush.msra.mxu0 0.0
        %752 = vmatpush.msra.mxu0 0.0
        %753 = vmatpush.msra.mxu0 0.0
        %754 = vmatpush.msra.mxu0 0.0
        %755 = vmatpush.msra.mxu0 0.0
        %756 = vmatpush.msra.mxu0 0.0
        %757 = vmatpush.msra.mxu0 %v622
        %758 = vmatpush.msra.mxu0 %v620
        %759 = vmatpush.msra.mxu0 %v618
        %760 = vmatpush.msra.mxu0 %v616
        %761 = vmatmul.f32.gmra.mxu0 %v681
        %v762 = vpop.f32.mrf.mxu0
        %v763 = vadd.f32 %v642, %v762
        %764 = vmatmul.f32.gmra.mxu0 %v684
        %v765 = vpop.f32.mrf.mxu0
        %v766 = vadd.f32 %v647, %v765
        %767 = vmatmul.f32.gmra.mxu0 %v687
        %v768 = vpop.f32.mrf.mxu0
        %v769 = vadd.f32 %v652, %v768
        %770 = vmatmul.f32.gmra.mxu0 %v690
        %v771 = vpop.f32.mrf.mxu0
        %v772 = vadd.f32 %v657, %v771
        %773 = vmatmul.f32.gmra.mxu0 %v693
        %v774 = vpop.f32.mrf.mxu0
        %v775 = vadd.f32 %v662, %v774
        %776 = vmatmul.f32.gmra.mxu0 %v696
        %v777 = vpop.f32.mrf.mxu0
        %v778 = vadd.f32 %v667, %v777
        %779 = vmatmul.f32.gmra.mxu0 %v699
        %v780 = vpop.f32.mrf.mxu0
        %v781 = vadd.f32 %v672, %v780
        %782 = vmatmul.f32.gmra.mxu0 %v702
        %v783 = vpop.f32.mrf.mxu0
        %v784 = vadd.f32 %v677, %v783
        %785 = vdwg.mxu0
        %v786 = vtanh.pop %v722
        %v787 = vtanh.pop %v763
        %v788 = vtanh.pop %v725
        %v789 = vtanh.pop %v766
        %v790 = vtanh.pop %v728
        %v791 = vtanh.pop %v769
        %v792 = vtanh.pop %v731
        %v793 = vtanh.pop %v772
        %v794 = vtanh.pop %v734
        %v795 = vtanh.pop %v775
        %v796 = vtanh.pop %v737
        %v797 = vtanh.pop %v778
        %v798 = vtanh.pop %v740
        %v799 = vtanh.pop %v781
        %v800 = vtanh.pop %v743
        %v801 = vtanh.pop %v784
        %v802 = vld [vmem:[%s6] sm:$0xff]
        %v803 = vld [vmem:[%s7] sm:$0xff]
        %vm804 = vcmask 15360
        %v806 = vsel %vm804, %v803, 0
        %v809 = vsel %vm804, %v388, 0
        %v812 = vsel %vm804, %v389, 0
        %v815 = vsel %vm804, %v390, 0
        %v818 = vsel %vm804, %v391, 0
        %v821 = vsel %vm804, %v392, 0
        %v824 = vsel %vm804, %v393, 0
        %v827 = vsel %vm804, %v394, 0
        %v830 = vsel %vm804, %v395, 0
        %v833 = vsel %vm804, %v396, 0
        %v836 = vsel %vm804, %v397, 0
        %v839 = vsel %vm804, %v398, 0
        %v842 = vsel %vm804, %v399, 0
        %v845 = vsel %vm804, %v400, 0
        %v848 = vsel %vm804, %v401, 0
        %v851 = vsel %vm804, %v402, 0
        %v854 = vsel %vm804, %v403, 0
        %v857 = vsel %vm804, %v404, 0
        %v860 = vsel %vm804, %v405, 0
        %v863 = vsel %vm804, %v406, 0
        %v866 = vsel %vm804, %v407, 0
        %v869 = vsel %vm804, %v408, 0
        %v872 = vsel %vm804, %v409, 0
        %v875 = vsel %vm804, %v410, 0
        %v878 = vsel %vm804, %v411, 0
        %v881 = vsel %vm804, %v412, 0
        %v884 = vsel %vm804, %v413, 0
        %v887 = vsel %vm804, %v414, 0
        %v890 = vsel %vm804, %v415, 0
        %v893 = vsel %vm804, %v416, 0
        %v896 = vsel %vm804, %v417, 0
        %v899 = vsel %vm804, %v418, 0
        %v902 = vsel %vm804, %v419, 0
        %904 = vmatpush.xpose.msra.mxu0 %v854
        %905 = vmatpush.xpose.msra.mxu0 %v851
        %906 = vmatpush.xpose.msra.mxu0 %v848
        %907 = vmatpush.xpose.msra.mxu0 %v845
        %908 = vmatpush.xpose.msra.mxu0 %v842
        %909 = vmatpush.xpose.msra.mxu0 %v839
        %910 = vmatpush.xpose.msra.mxu0 %v836
        %911 = vmatpush.xpose.msra.mxu0 %v833
        %912 = vmatpush.xpose.msra.mxu0 %v830
        %913 = vmatpush.xpose.msra.mxu0 %v827
        %914 = vmatpush.xpose.msra.mxu0 %v824
        %915 = vmatpush.xpose.msra.mxu0 %v821
        %916 = vmatpush.xpose.msra.mxu0 %v818
        %917 = vmatpush.xpose.msra.mxu0 %v815
        %918 = vmatpush.xpose.msra.mxu0 %v812
        %919 = vmatpush.xpose.msra.mxu0 %v809
        %920 = vmatmul.f32.gmra.mxu0 %v806
        %v921 = vpop.f32.mrf.mxu0
        %v922 = vadd.f32 0.0, %v921
        %923 = vdwg.mxu0
        %924 = vmatpush.xpose.msra.mxu0 %v902
        %925 = vmatpush.xpose.msra.mxu0 %v899
        %926 = vmatpush.xpose.msra.mxu0 %v896
        %927 = vmatpush.xpose.msra.mxu0 %v893
        %928 = vmatpush.xpose.msra.mxu0 %v890
        %929 = vmatpush.xpose.msra.mxu0 %v887
        %930 = vmatpush.xpose.msra.mxu0 %v884
        %931 = vmatpush.xpose.msra.mxu0 %v881
        %932 = vmatpush.xpose.msra.mxu0 %v878
        %933 = vmatpush.xpose.msra.mxu0 %v875
        %934 = vmatpush.xpose.msra.mxu0 %v872
        %935 = vmatpush.xpose.msra.mxu0 %v869
        %936 = vmatpush.xpose.msra.mxu0 %v866
        %937 = vmatpush.xpose.msra.mxu0 %v863
        %938 = vmatpush.xpose.msra.mxu0 %v860
        %939 = vmatpush.xpose.msra.mxu0 %v857
        %940 = vmatmul.f32.gmra.mxu0 %v806
        %v941 = vpop.f32.mrf.mxu0
        %v942 = vadd.f32 0.0, %v941
        %943 = vdwg.mxu0
        %vm944 = vcmask 523264
        %v946 = vsel %vm944, %v802, 0
        %948 = vmatpush.msra.mxu0 0.0
        %949 = vmatpush.msra.mxu0 0.0
        %950 = vmatpush.msra.mxu0 0.0
        %951 = vmatpush.msra.mxu0 0.0
        %952 = vmatpush.msra.mxu0 0.0
        %953 = vmatpush.msra.mxu0 0.0
        %954 = vmatpush.msra.mxu0 0.0
        %955 = vmatpush.msra.mxu0 0.0
        %956 = vmatpush.msra.mxu0 %v800
        %957 = vmatpush.msra.mxu0 %v798
        %958 = vmatpush.msra.mxu0 %v796
        %959 = vmatpush.msra.mxu0 %v794
        %960 = vmatpush.msra.mxu0 %v792
        %961 = vmatpush.msra.mxu0 %v790
        %962 = vmatpush.msra.mxu0 %v788
        %963 = vmatpush.msra.mxu0 %v786
        %964 = vmatmul.f32.gmra.mxu0 %v946
        %v965 = vpop.f32.mrf.mxu0
        %v966 = vadd.f32 %v922, %v965
        %967 = vdwg.mxu0
        %968 = vmatpush.msra.mxu0 0.0
        %969 = vmatpush.msra.mxu0 0.0
        %970 = vmatpush.msra.mxu0 0.0
        %971 = vmatpush.msra.mxu0 0.0
        %972 = vmatpush.msra.mxu0 0.0
        %973 = vmatpush.msra.mxu0 0.0
        %974 = vmatpush.msra.mxu0 0.0
        %975 = vmatpush.msra.mxu0 0.0
        %976 = vmatpush.msra.mxu0 %v801
        %977 = vmatpush.msra.mxu0 %v799
        %978 = vmatpush.msra.mxu0 %v797
        %979 = vmatpush.msra.mxu0 %v795
        %980 = vmatpush.msra.mxu0 %v793
        %981 = vmatpush.msra.mxu0 %v791
        %982 = vmatpush.msra.mxu0 %v789
        %983 = vmatpush.msra.mxu0 %v787
        %984 = vmatmul.f32.gmra.mxu0 %v946
        %v985 = vpop.f32.mrf.mxu0
        %v986 = vadd.f32 %v942, %v985
        %987 = vdwg.mxu0
        %v988 = vld [vmem:[%s8] sm:$0xff]
        %990 = vset.pattern.permute.xlu0 0
        %991 = vperm.xlu0 %990, %v988
        %v992 = vpop.permute.xlu0 %991
        %v994 = vadd.f32 %v966, %v992
        %v995 = vadd.f32 %v986, %v992
        %v996 = vrot.slane %v994, 4
        %v997 = vmax.f32 %v994, %v996
        %v998 = vrot.slane %v997, 2
        %v999 = vmax.f32 %v997, %v998
        %v1000 = vrot.slane %v999, 1
        %v1001 = vmax.f32 %v999, %v1000
        %v1002 = vrot.slane %v995, 4
        %v1003 = vmax.f32 %v995, %v1002
        %v1004 = vrot.slane %v1003, 2
        %v1005 = vmax.f32 %v1003, %v1004
        %v1006 = vrot.slane %v1005, 1
        %v1007 = vmax.f32 %v1005, %v1006
        %v1008 = vsub.f32 %v994, %v1001
        %v1009 = vsub.f32 %v995, %v1007
        %v1010 = vmul.f32 %v1008, 1.442695
        %v1011 = vpow.pop %v1010
        %v1012 = vmul.f32 %v1009, 1.442695
        %v1013 = vpow.pop %v1012
        %v1014 = vrot.slane %v1011, 4
        %v1015 = vadd.f32 %v1011, %v1014
        %v1016 = vrot.slane %v1015, 2
        %v1017 = vadd.f32 %v1015, %v1016
        %v1018 = vrot.slane %v1017, 1
        %v1019 = vadd.f32 %v1017, %v1018
        %v1020 = vrot.slane %v1013, 4
        %v1021 = vadd.f32 %v1013, %v1020
        %v1022 = vrot.slane %v1021, 2
        %v1023 = vadd.f32 %v1021, %v1022
        %v1024 = vrot.slane %v1023, 1
        %v1025 = vadd.f32 %v1023, %v1024
        %v1026 = vrcp.pop %v1019
        %v1027 = vmul.f32 %v1019, %v1026
        %v1028 = vsub.f32 1.0, %v1027
        %v1029 = vmul.f32 %v1026, %v1028
        %v1030 = vadd.f32 %v1026, %v1029
        %vm1031 = vweird.f32 %v1019
        %vm1032 = vweird.f32 %v1026
        %vm1033 = vmor %vm1031, %vm1032
        %v1034 = vsel %vm1033, %v1026, %v1030
        %v1035 = vand.u32 2147483647, %v1019
        %vm1036 = vcmp.eq.f32.partialorder %v1035, 8.507059e+37
        %v1037 = vand.u32 %v1019, 2147483648
        %v1038 = vor.u32 1.1754944e-38, %v1037
        %v1039 = vsel %vm1036, %v1038, %v1034
        %v1040 = vmul.f32 %v1011, %v1039
        %v1041 = vrcp.pop %v1025
        %v1042 = vmul.f32 %v1025, %v1041
        %v1043 = vsub.f32 1.0, %v1042
        %v1044 = vmul.f32 %v1041, %v1043
        %v1045 = vadd.f32 %v1041, %v1044
        %vm1046 = vweird.f32 %v1025
        %vm1047 = vweird.f32 %v1041
        %vm1048 = vmor %vm1046, %vm1047
        %v1049 = vsel %vm1048, %v1041, %v1045
        %v1050 = vand.u32 2147483647, %v1025
        %vm1051 = vcmp.eq.f32.partialorder %v1050, 8.507059e+37
        %v1052 = vand.u32 %v1025, 2147483648
        %v1053 = vor.u32 1.1754944e-38, %v1052
        %v1054 = vsel %vm1051, %v1053, %v1049
        %v1055 = vmul.f32 %v1013, %v1054
        %1056 = vst [vmem:[%s342] sm:$0xff] %v1040
        %1057 = vst [vmem:[%s342 + $0x8] sm:$0xff] %v1055
        %s1058 = sand.u32 %s230, 1
        %s1059 = scalar_lea.sflag [#allocation3], %s1058
        %s1060 = sand.u32 %s230, 1
        %s1061 = smul.addr %s1060, 16
        %s1062 = scalar_lea.vmem [#allocation2], %s1061
        // Predicated region
        $region57: #{tpu_custom_call.1} parent=55 // pred_check
          %p1063 = pneg %p240
        $region58: #{tpu_custom_call.1} parent=55 // pred_check_branch
          %1065 = sbr.rel (%p1063) target = $region60
        $region59: #{tpu_custom_call.1} parent=55 // pred_region
          %s1066 = smul.u32 2, %s23
          %1068 = vsyncadd %s1059, 0
          %s1069 = smul.addr %s1066, 8
          %s1070 = scalar_lea.hbm %s9, %s1069
          %s1072 = sshll.u32 %s1062, 4
          %s1073 = int_to_ptr.vmem [resolvable:$true] %s1072
          %s1074 = sshll.u32 %s1070, 4
          %s1075 = int_to_ptr.hbm [resolvable:$true] %s1074
          %1077 = dma.vmem_to_hbm [thread:$0]  %s1073, 256, %s1075, %s1059
        $region60: #{tpu_custom_call.1} parent=55 // pred_fallthru
          _
      $region56: #{tpu_custom_call.1} parent=5 // pred_fallthru
        _
      %p1078 = scmp.le.s32.totalorder 2, %s18
      // Predicated region
      $region61: #{tpu_custom_call.1} parent=5 // pred_check
        %p1079 = pneg %p1078
      $region62: #{tpu_custom_call.1} parent=5 // pred_check_branch
        %1081 = sbr.rel (%p1079) target = $region64
      $region63: #{tpu_custom_call.1} parent=5 // pred_region
        %s1082 = ssub.s32 %s18, 2
        // Predicated region
        $region65: #{tpu_custom_call.1} parent=63 // pred_check
          %p1083 = pneg %p246
        $region66: #{tpu_custom_call.1} parent=63 // pred_check_branch
          %1085 = sbr.rel (%p1083) target = $region68
        $region67: #{tpu_custom_call.1} parent=63 // pred_region
          %s1086 = sand.u32 %s231, 1
          %s1087 = scalar_lea.sflag [#allocation3], %s1086
          %s1088 = sand.u32 %s231, 1
          %s1089 = smul.addr %s1088, 16
          %s1090 = scalar_lea.vmem [#allocation2], %s1089
          %1092 = dma.done %s1087, 256
        $region68: #{tpu_custom_call.1} parent=63 // pred_fallthru
          _
      $region64: #{tpu_custom_call.1} parent=5 // pred_fallthru
        _
    $region6: #{tpu_custom_call.1} parent=1 // loop_footer
      %s22 = sadd.s32 1, %s18
    $region7: #{tpu_custom_call.1} parent=1 // loop_footer_branch
      %17 = sbr.rel target = $region3
    $region8: #{tpu_custom_call.1} parent=1 // loop_exit
      _
    %1093 = vsyncpa [#allocation3], 1
    %s1094 = scalar_lea.sflag [#allocation3], 1
    %1095 = vsyncpa %s1094, 1

</llo_original>
